<compile_context>
chip_gen: v7x
topology: tpu7x:2x2x1
jax: 0.10.0
libtpu: 0.0.40
codegen_flags: <defaults>
</compile_context>

<pallas_src>
import functools

import jax
import jax.numpy as jnp
from jax.experimental import pallas as pl
from jax.experimental.pallas import tpu as pltpu


# ---------------------------------------------------------------------------
# Kernel 1: batched meta_net MLP + ctx shift, lane-dense flat output
# ---------------------------------------------------------------------------
def meta_ctx_kernel(im_ref, w1_ref, b1_ref, w2_ref, b2_ref, ctx_ref, out_ref,
                    *, n_ctx, cast_bf16):
    # im: (TB, vis_dim), w1: (vis_dim, hid), b1: (1, hid),
    # w2: (hid, ctx_dim), b2: (1, ctx_dim), ctx: (1, n_ctx*ctx_dim)  [flat]
    # out: (TB, n_ctx*ctx_dim)                                        [flat]
    im = im_ref[...]
    w1 = w1_ref[...]
    w2 = w2_ref[...]
    if cast_bf16:
        im = im.astype(jnp.bfloat16)
        w1 = w1.astype(jnp.bfloat16)
        w2 = w2.astype(jnp.bfloat16)
    h = jnp.dot(im, w1, preferred_element_type=jnp.float32) + b1_ref[...]
    h = jnp.maximum(h, 0.0)                                    # ReLU
    if cast_bf16:
        h = h.astype(jnp.bfloat16)
    bias = jnp.dot(h, w2, preferred_element_type=jnp.float32) + b2_ref[...]
    # out[b, t*D + d] = ctx[t, d] + bias[b, d]:
    # replicate the (TB, D) bias n_ctx times along lanes and add flat ctx.
    bias_rep = jnp.concatenate([bias] * n_ctx, axis=-1)
    out_ref[...] = ctx_ref[...] + bias_rep


def compute_ctx_shifted_flat(im_features, w1, b1, w2, b2, ctx_flat, n_ctx,
                             *, batch_tile=256, use_bf16_matmul=None):
    B, vis_dim = im_features.shape
    hid = w1.shape[1]
    ctx_dim = w2.shape[1]
    d_ctx = ctx_flat.shape[1]                        # n_ctx * ctx_dim
    if use_bf16_matmul is None:
        # Only pays off at real CLIP sizes; keep f32 accuracy at toy sizes.
        use_bf16_matmul = min(vis_dim, ctx_dim) >= 512
    tb = B if B <= batch_tile else batch_tile        # multiple of 8 when tiled
    grid = (pl.cdiv(B, tb),)
    return pl.pallas_call(
        functools.partial(meta_ctx_kernel, n_ctx=n_ctx,
                          cast_bf16=use_bf16_matmul),
        out_shape=jax.ShapeDtypeStruct((B, d_ctx), jnp.float32),
        grid_spec=pltpu.PrefetchScalarGridSpec(
            num_scalar_prefetch=0,
            grid=grid,
            in_specs=[
                pl.BlockSpec((tb, vis_dim), lambda i: (i, 0)),
                pl.BlockSpec((vis_dim, hid), lambda i: (0, 0)),
                pl.BlockSpec((1, hid), lambda i: (0, 0)),
                pl.BlockSpec((hid, ctx_dim), lambda i: (0, 0)),
                pl.BlockSpec((1, ctx_dim), lambda i: (0, 0)),
                pl.BlockSpec((1, d_ctx), lambda i: (0, 0)),
            ],
            out_specs=pl.BlockSpec((tb, d_ctx), lambda i: (i, 0)),
        ),
        compiler_params=pltpu.CompilerParams(
            dimension_semantics=("parallel",)),
    )(im_features, w1, b1, w2, b2, ctx_flat)


# ---------------------------------------------------------------------------
# Kernel 2: construct_prompts — [prefix ; ctx_shifted ; suffix], lane-dense
# ---------------------------------------------------------------------------
def assemble_prompts_kernel(prefix_ref, suffix_ref, ctx_ref, out_ref,
                            *, aligned):
    # prefix_ref: (TC, 1*D), suffix_ref: (TC, l_suf*D)   (token axis folded
    # into lanes), ctx_ref: (1, 1, n_ctx*D), out_ref: (1, TC, ctx_len*D)
    tc = prefix_ref.shape[0]
    d_pre = prefix_ref.shape[1]
    d_suf = suffix_ref.shape[1]
    d_ctx = ctx_ref.shape[-1]
    dt = out_ref.dtype
    ctx_b = jnp.broadcast_to(ctx_ref[0], (tc, d_ctx))
    if aligned:
        # Every segment is a 128-lane multiple: three direct, unmasked
        # sub-range stores at static lane offsets — no (TC, d_out) temporary.
        out_ref[0, :, 0:d_pre] = prefix_ref[...].astype(dt)
        out_ref[0, :, d_pre:d_pre + d_ctx] = ctx_b.astype(dt)
        out_ref[0, :, d_pre + d_ctx:d_pre + d_ctx + d_suf] = (
            suffix_ref[...].astype(dt))
    else:
        # Unaligned (toy) dims: build the tile once and do one full store.
        out_ref[0] = jnp.concatenate(
            [prefix_ref[...], ctx_b, suffix_ref[...]], axis=-1).astype(dt)


def _maybe_single_buffered(block_shape, index_map, nbytes):
    # Single-buffer large VMEM-resident constants: their block index never
    # changes across the inner grid axis, so a second pipeline buffer is pure
    # VMEM waste (frees headroom for bigger class tiles on v7x's 64 MiB VMEM).
    # Tiny blocks keep the default double buffering.
    if nbytes >= (1 << 20):
        return pl.BlockSpec(block_shape, index_map,
                            pipeline_mode=pl.Buffered(1))
    return pl.BlockSpec(block_shape, index_map)


def assemble_prompts(prefix_flat, suffix_flat, ctx_flat, *, class_tile=128,
                     out_dtype=jnp.float32):
    # prefix_flat: (NC, 1*D), suffix_flat: (NC, l_suf*D), ctx_flat: (B, n_ctx*D)
    n_classes, d_pre = prefix_flat.shape
    _, d_suf = suffix_flat.shape
    B, d_ctx = ctx_flat.shape
    d_out = d_pre + d_ctx + d_suf                    # = ctx_len * ctx_dim
    # class_tile is a multiple of 8 (and 16, for bf16 sublane packing on v5e).
    tc = n_classes if n_classes <= class_tile else class_tile
    n_c_tiles = pl.cdiv(n_classes, tc)
    aligned = (d_pre % 128 == 0) and (d_ctx % 128 == 0) and (d_suf % 128 == 0)
    # Present ctx as (B, 1, d_ctx) so the block's last two dims match the
    # array's last two dims exactly (clean (8,128) tiling).
    ctx3 = ctx_flat.reshape(B, 1, d_ctx)
    itemsize = jnp.dtype(out_dtype).itemsize
    block_bytes = (4 * (tc * d_pre + tc * d_suf + d_ctx)
                   + itemsize * tc * d_out)
    vmem_limit = int(min(max(4 * block_bytes, 32 << 20), 64 << 20))
    flat = pl.pallas_call(
        functools.partial(assemble_prompts_kernel, aligned=aligned),
        out_shape=jax.ShapeDtypeStruct((B, n_classes, d_out), out_dtype),
        grid_spec=pltpu.PrefetchScalarGridSpec(
            num_scalar_prefetch=0,
            # B is the inner axis so the (big) prefix/suffix blocks stay
            # VMEM-resident across it; both axes are independent -> parallel.
            grid=(n_c_tiles, B),
            in_specs=[
                _maybe_single_buffered((tc, d_pre), lambda c, b: (c, 0),
                                       4 * tc * d_pre),
                _maybe_single_buffered((tc, d_suf), lambda c, b: (c, 0),
                                       4 * tc * d_suf),
                pl.BlockSpec((1, 1, d_ctx), lambda c, b: (b, 0, 0)),
            ],
            out_specs=pl.BlockSpec((1, tc, d_out), lambda c, b: (b, c, 0)),
        ),
        compiler_params=pltpu.CompilerParams(
            dimension_semantics=("parallel", "parallel"),
            vmem_limit_bytes=vmem_limit),
    )(prefix_flat, suffix_flat, ctx3)
    return flat                                      # (B, n_classes, d_out)


# ---------------------------------------------------------------------------
# PromptLearner wrapper (parameter setup + forward)
# ---------------------------------------------------------------------------
class PromptLearnerJAX:
    def __init__(self, key, n_ctx, ctx_dim, vis_dim, prompt_dtype=jnp.float32):
        self.n_ctx = n_ctx
        self.ctx_dim = ctx_dim
        self.vis_dim = vis_dim
        self.prompt_dtype = prompt_dtype
        hid = max(vis_dim // 16, 1)
        k = jax.random.split(key, 5)
        # ctx_vectors ~ Normal(0, 0.02)
        self.ctx = 0.02 * jax.random.normal(k[0], (n_ctx, ctx_dim), jnp.float32)
        self.ctx_flat = self.ctx.reshape(1, n_ctx * ctx_dim)
        # meta_net: Linear(vis_dim, hid) -> ReLU -> Linear(hid, ctx_dim)
        self.w1 = 0.05 * jax.random.normal(k[1], (vis_dim, hid), jnp.float32)
        self.b1 = 0.01 * jax.random.normal(k[2], (1, hid), jnp.float32)
        self.w2 = 0.05 * jax.random.normal(k[3], (hid, ctx_dim), jnp.float32)
        self.b2 = 0.01 * jax.random.normal(k[4], (1, ctx_dim), jnp.float32)
        # TODO(synk): clip.tokenize / CLIP token_embedding are string ops with
        # no Pallas equivalent; token_prefix/suffix buffers are synthesized.

    def init_prompts(self, key, n_classes_per_task, context_length):
        assert context_length > self.n_ctx + 1, (
            "context_length must exceed n_ctx + 1 (prefix token)")
        self.n_tasks = len(n_classes_per_task)
        self.n_classes = list(n_classes_per_task)
        self.total_classes = int(sum(n_classes_per_task))
        self.context_length = context_length
        l_suf = context_length - 1 - self.n_ctx
        self.l_suf = l_suf
        self.token_prefix = []           # per-task (nc, 1, D)     (reference)
        self.token_suffix = []           # per-task (nc, l_suf, D) (reference)
        keys = jax.random.split(key, 2 * self.n_tasks)
        pre_flat, suf_flat = [], []
        for i, nc in enumerate(n_classes_per_task):
            pre = jax.random.normal(keys[2 * i], (nc, 1, self.ctx_dim),
                                    jnp.float32)
            suf = jax.random.normal(keys[2 * i + 1], (nc, l_suf, self.ctx_dim),
                                    jnp.float32)
            self.token_prefix.append(pre)
            self.token_suffix.append(suf)
            # fold the token axis into lanes (contiguous, free reshape)
            pre_flat.append(pre.reshape(nc, self.ctx_dim))
            suf_flat.append(suf.reshape(nc, l_suf * self.ctx_dim))
        # Concatenate across tasks: one kernel launch assembles all tasks.
        self.prefix_all_flat = jnp.concatenate(pre_flat, axis=0)
        self.suffix_all_flat = jnp.concatenate(suf_flat, axis=0)

    def forward(self, im_features):
        B = im_features.shape[0]
        ctx_shifted_flat = compute_ctx_shifted_flat(
            im_features, self.w1, self.b1, self.w2, self.b2,
            self.ctx_flat, self.n_ctx)                       # (B, n_ctx*D)
        flat = assemble_prompts(self.prefix_all_flat, self.suffix_all_flat,
                                ctx_shifted_flat,
                                out_dtype=self.prompt_dtype)
        prompts_all = flat.reshape(B, self.total_classes,
                                   self.context_length, self.ctx_dim)
        prompts_multitask = []
        start = 0
        for nc in self.n_classes:
            prompts_multitask.append(prompts_all[:, start:start + nc])
            start += nc
        return prompts_multitask

    # pure-JAX reference (highest matmul precision) for verification
    def forward_ref(self, im_features):
        hp = jax.lax.Precision.HIGHEST
        h = jnp.maximum(
            jnp.dot(im_features, self.w1, precision=hp) + self.b1, 0.0)
        bias = jnp.dot(h, self.w2, precision=hp) + self.b2     # (B, D)
        ctx_shifted = self.ctx[None, :, :] + bias[:, None, :]
        out = []
        B = im_features.shape[0]
        for i in range(self.n_tasks):
            nc = self.n_classes[i]
            pre = jnp.broadcast_to(self.token_prefix[i][None],
                                   (B, nc, 1, self.ctx_dim))
            suf = jnp.broadcast_to(self.token_suffix[i][None],
                                   (B, nc, self.l_suf, self.ctx_dim))
            ctxb = jnp.broadcast_to(ctx_shifted[:, None, :, :],
                                    (B, nc, self.n_ctx, self.ctx_dim))
            out.append(jnp.concatenate([pre, ctxb, suf], axis=2)
                       .astype(self.prompt_dtype))
        return out


if __name__ == "__main__":
    key = jax.random.PRNGKey(0)
    k_params, k_buffers, k_input = jax.random.split(key, 3)

    # Small but lane-aligned shapes: ctx_dim = 128 exercises the aligned
    # sub-range-store fast path in kernel 2 (real CLIP D=512 takes it too).
    B, vis_dim, ctx_dim, n_ctx = 2, 128, 128, 4
    context_length = 16                       # 1 prefix + 4 ctx + 11 suffix
    n_classes_per_task = [3, 2]

    learner = PromptLearnerJAX(k_params, n_ctx=n_ctx, ctx_dim=ctx_dim,
                               vis_dim=vis_dim)
    learner.init_prompts(k_buffers, n_classes_per_task, context_length)

    im_features = jax.random.normal(k_input, (B, vis_dim), jnp.float32)

    prompts = learner.forward(im_features)
    prompts = [jax.block_until_ready(p) for p in prompts]

    prompts_ref = learner.forward_ref(im_features)
    ok = True
    for p, pr, nc in zip(prompts, prompts_ref, n_classes_per_task):
        ok &= p.shape == (B, nc, context_length, ctx_dim)
        ok &= bool(jnp.allclose(p, pr, atol=1e-4, rtol=1e-4))

    if ok:
        print("KERNEL_OK")
    else:
        print("MISMATCH")
</pallas_src>

<mosaic_0001>
module attributes {stable_mosaic.version = 11 : i64} {
  func.func @meta_ctx_kernel(%arg0: i32, %arg1: memref<2x128xf32, #tpu.memory_space<vmem>>, %arg2: memref<128x8xf32, #tpu.memory_space<vmem>>, %arg3: memref<1x8xf32, #tpu.memory_space<vmem>>, %arg4: memref<8x128xf32, #tpu.memory_space<vmem>>, %arg5: memref<1x128xf32, #tpu.memory_space<vmem>>, %arg6: memref<1x512xf32, #tpu.memory_space<vmem>>, %arg7: memref<2x512xf32, #tpu.memory_space<vmem>>) attributes {dimension_semantics = [#tpu.dimension_semantics<parallel>], iteration_bounds = array<i64: 1>, scalar_prefetch = 0 : i64, scratch_operands = 0 : i64, tpu.core_type = #tpu.core_type<tc>, window_params = [{transform_indices = @transform_0, window_bounds = array<i64: 2, 128>}, {pipeline_mode = #tpu.pipeline_mode<synchronous>, transform_indices = @transform_1, window_bounds = array<i64: 128, 8>}, {pipeline_mode = #tpu.pipeline_mode<synchronous>, transform_indices = @transform_2, window_bounds = array<i64: 1, 8>}, {pipeline_mode = #tpu.pipeline_mode<synchronous>, transform_indices = @transform_3, window_bounds = array<i64: 8, 128>}, {pipeline_mode = #tpu.pipeline_mode<synchronous>, transform_indices = @transform_4, window_bounds = array<i64: 1, 128>}, {pipeline_mode = #tpu.pipeline_mode<synchronous>, transform_indices = @transform_5, window_bounds = array<i64: 1, 512>}, {transform_indices = @transform_6, window_bounds = array<i64: 2, 512>}]} {
    %c0 = arith.constant 0 : index
    %c0_0 = arith.constant 0 : index
    %0 = vector.load %arg1[%c0, %c0_0] : memref<2x128xf32, #tpu.memory_space<vmem>>, vector<2x128xf32>
    %c0_1 = arith.constant 0 : index
    %c0_2 = arith.constant 0 : index
    %1 = vector.load %arg2[%c0_1, %c0_2] : memref<128x8xf32, #tpu.memory_space<vmem>>, vector<128x8xf32>
    %c0_3 = arith.constant 0 : index
    %c0_4 = arith.constant 0 : index
    %2 = vector.load %arg4[%c0_3, %c0_4] : memref<8x128xf32, #tpu.memory_space<vmem>>, vector<8x128xf32>
    %cst = arith.constant dense<0.000000e+00> : vector<2x8xf32>
    %3 = tpu.matmul %0, %1, %cst {dimension_numbers = #tpu.dot_dimension_numbers<[1], [0], [0], [1], [0, 0, 1, 1], [], []>} : vector<2x128xf32>, vector<128x8xf32>, vector<2x8xf32> -> vector<2x8xf32>
    %c0_5 = arith.constant 0 : index
    %c0_6 = arith.constant 0 : index
    %4 = vector.load %arg3[%c0_5, %c0_6] : memref<1x8xf32, #tpu.memory_space<vmem>>, vector<1x8xf32>
    %5 = vector.broadcast %4 : vector<1x8xf32> to vector<2x8xf32>
    %6 = arith.addf %3, %5 : vector<2x8xf32>
    %cst_7 = arith.constant 0.000000e+00 : f32
    %7 = vector.broadcast %cst_7 : f32 to vector<2x8xf32>
    %8 = arith.maximumf %6, %7 : vector<2x8xf32>
    %cst_8 = arith.constant dense<0.000000e+00> : vector<2x128xf32>
    %9 = tpu.matmul %8, %2, %cst_8 {dimension_numbers = #tpu.dot_dimension_numbers<[1], [0], [0], [1], [0, 0, 1, 1], [], []>} : vector<2x8xf32>, vector<8x128xf32>, vector<2x128xf32> -> vector<2x128xf32>
    %c0_9 = arith.constant 0 : index
    %c0_10 = arith.constant 0 : index
    %10 = vector.load %arg5[%c0_9, %c0_10] : memref<1x128xf32, #tpu.memory_space<vmem>>, vector<1x128xf32>
    %11 = vector.broadcast %10 : vector<1x128xf32> to vector<2x128xf32>
    %12 = arith.addf %9, %11 : vector<2x128xf32>
    %13 = tpu.concatenate %12, %12, %12, %12 in 1 : vector<2x128xf32>, vector<2x128xf32>, vector<2x128xf32>, vector<2x128xf32> -> vector<2x512xf32>
    %c0_11 = arith.constant 0 : index
    %c0_12 = arith.constant 0 : index
    %14 = vector.load %arg6[%c0_11, %c0_12] : memref<1x512xf32, #tpu.memory_space<vmem>>, vector<1x512xf32>
    %15 = vector.broadcast %14 : vector<1x512xf32> to vector<2x512xf32>
    %16 = arith.addf %15, %13 : vector<2x512xf32>
    %c0_13 = arith.constant 0 : index
    %c0_14 = arith.constant 0 : index
    %17 = vector.load %arg7[%c0_13, %c0_14] : memref<2x512xf32, #tpu.memory_space<vmem>>, vector<2x512xf32>
    tpu.vector_store %arg7[%c0_13, %c0_14], %16 {strides = array<i32>} : memref<2x512xf32, #tpu.memory_space<vmem>>, vector<2x512xf32>,
    return
  }
  func.func @transform_0(%arg0: i32) -> (i32, i32) {
    %c0_i32 = arith.constant 0 : i32
    %c0_i32_0 = arith.constant 0 : i32
    return %arg0, %c0_i32 : i32, i32
  }
  func.func @transform_1(%arg0: i32) -> (i32, i32) {
    %c0_i32 = arith.constant 0 : i32
    %c0_i32_0 = arith.constant 0 : i32
    %c0_i32_1 = arith.constant 0 : i32
    return %c0_i32, %c0_i32_0 : i32, i32
  }
  func.func @transform_2(%arg0: i32) -> (i32, i32) {
    %c0_i32 = arith.constant 0 : i32
    %c0_i32_0 = arith.constant 0 : i32
    %c0_i32_1 = arith.constant 0 : i32
    return %c0_i32, %c0_i32_0 : i32, i32
  }
  func.func @transform_3(%arg0: i32) -> (i32, i32) {
    %c0_i32 = arith.constant 0 : i32
    %c0_i32_0 = arith.constant 0 : i32
    %c0_i32_1 = arith.constant 0 : i32
    return %c0_i32, %c0_i32_0 : i32, i32
  }
  func.func @transform_4(%arg0: i32) -> (i32, i32) {
    %c0_i32 = arith.constant 0 : i32
    %c0_i32_0 = arith.constant 0 : i32
    %c0_i32_1 = arith.constant 0 : i32
    return %c0_i32, %c0_i32_0 : i32, i32
  }
  func.func @transform_5(%arg0: i32) -> (i32, i32) {
    %c0_i32 = arith.constant 0 : i32
    %c0_i32_0 = arith.constant 0 : i32
    %c0_i32_1 = arith.constant 0 : i32
    return %c0_i32, %c0_i32_0 : i32, i32
  }
  func.func @transform_6(%arg0: i32) -> (i32, i32) {
    %c0_i32 = arith.constant 0 : i32
    %c0_i32_0 = arith.constant 0 : i32
    return %arg0, %c0_i32 : i32, i32
  }
}

</mosaic_0001>

<llo_original>
// kernel: tpu_custom_call.1
$region0: #{tpu_custom_call.1}
  #allocation0 [shape = 'u32[]', space=smem, size = 0x4, offset = 0x4, fixed_abs, tag = 'smem constant byte address 0x4 - core index']
  #allocation1 [shape = 'u32[144,128]{1,0:T(1,128)}', space=vmem, size = 0x12000, scoped, tag = 'internal scratch']
  %s0 = inlined_call_operand.vmem [shape: f32[2,128], index: 0, kind: input, shape index: {}]
  %s1 = inlined_call_operand.vmem [shape: f32[128,8], index: 1, kind: input, shape index: {}]
  %s2 = inlined_call_operand.vmem [shape: f32[1,8], index: 2, kind: input, shape index: {}]
  %s3 = inlined_call_operand.vmem [shape: f32[8,128], index: 3, kind: input, shape index: {}]
  %s4 = inlined_call_operand.vmem [shape: f32[1,128], index: 4, kind: input, shape index: {}]
  %s5 = inlined_call_operand.vmem [shape: f32[1,512], index: 5, kind: input, shape index: {}]
  %s6 = inlined_call_operand.hbm [shape: f32[2,512], index: 6, kind: output, shape index: {}]
  %s7 = sld [smem:[#allocation0]]
  $region34: #{tpu_custom_call.1} parent=0
    _
  %s9 = ssub.s32 1, %s7
  %s10 = scalar_select 0, %s9, %s7
  $region1: #{tpu_custom_call.1} parent=0
    #allocation2 [shape = 'u8[4096]{0}', space=vmem, size = 0x1000, scoped, tag = 'output window, operand 0, single buffered']
    #allocation3 [shape = 's32[1]{0}', space=sflag, size = 0x4, scoped, tag = 'scoped memory for tpu_custom_call.1']
    %11 = vsyncpa [#allocation3], 0
    // Predicated region
    $region2: #{tpu_custom_call.1} parent=1 // pred_check
      _
    $region3: #{tpu_custom_call.1} parent=1 // pred_check_branch
      %13 = sbr.rel (0) target = $region5
    $region4: #{tpu_custom_call.1} parent=1 // pred_region
      _
    $region5: #{tpu_custom_call.1} parent=1 // pred_fallthru
      _
    // Predicated region
    $region6: #{tpu_custom_call.1} parent=1 // pred_check
      _
    $region7: #{tpu_custom_call.1} parent=1 // pred_check_branch
      %15 = sbr.rel (0) target = $region9
    $region8: #{tpu_custom_call.1} parent=1 // pred_region
      _
    $region9: #{tpu_custom_call.1} parent=1 // pred_fallthru
      _
    // Predicated region
    $region10: #{tpu_custom_call.1} parent=1 // pred_check
      _
    $region11: #{tpu_custom_call.1} parent=1 // pred_check_branch
      %17 = sbr.rel (0) target = $region13
    $region12: #{tpu_custom_call.1} parent=1 // pred_region
      _
    $region13: #{tpu_custom_call.1} parent=1 // pred_fallthru
      _
    // Predicated region
    $region14: #{tpu_custom_call.1} parent=1 // pred_check
      _
    $region15: #{tpu_custom_call.1} parent=1 // pred_check_branch
      %19 = sbr.rel (0) target = $region17
    $region16: #{tpu_custom_call.1} parent=1 // pred_region
      _
    $region17: #{tpu_custom_call.1} parent=1 // pred_fallthru
      _
    // Predicated region
    $region18: #{tpu_custom_call.1} parent=1 // pred_check
      _
    $region19: #{tpu_custom_call.1} parent=1 // pred_check_branch
      %21 = sbr.rel (0) target = $region21
    $region20: #{tpu_custom_call.1} parent=1 // pred_region
      _
    $region21: #{tpu_custom_call.1} parent=1 // pred_fallthru
      _
    // Predicated region
    $region22: #{tpu_custom_call.1} parent=1 // pred_check
      _
    $region23: #{tpu_custom_call.1} parent=1 // pred_check_branch
      %23 = sbr.rel (0) target = $region25
    $region24: #{tpu_custom_call.1} parent=1 // pred_region
      _
    $region25: #{tpu_custom_call.1} parent=1 // pred_fallthru
      _
    %v24 = vld [vmem:[%s0] sm:$0x3]
    %v25 = vld [vmem:[%s1] sm:$0xff]
    %v26 = vld [vmem:[%s1 + $0x8] sm:$0xff]
    %v27 = vld [vmem:[%s1 + $0x10] sm:$0xff]
    %v28 = vld [vmem:[%s1 + $0x18] sm:$0xff]
    %v29 = vld [vmem:[%s1 + $0x20] sm:$0xff]
    %v30 = vld [vmem:[%s1 + $0x28] sm:$0xff]
    %v31 = vld [vmem:[%s1 + $0x30] sm:$0xff]
    %v32 = vld [vmem:[%s1 + $0x38] sm:$0xff]
    %v33 = vld [vmem:[%s1 + $0x40] sm:$0xff]
    %v34 = vld [vmem:[%s1 + $0x48] sm:$0xff]
    %v35 = vld [vmem:[%s1 + $0x50] sm:$0xff]
    %v36 = vld [vmem:[%s1 + $0x58] sm:$0xff]
    %v37 = vld [vmem:[%s1 + $0x60] sm:$0xff]
    %v38 = vld [vmem:[%s1 + $0x68] sm:$0xff]
    %v39 = vld [vmem:[%s1 + $0x70] sm:$0xff]
    %v40 = vld [vmem:[%s1 + $0x78] sm:$0xff]
    %v41 = vld [vmem:[%s3] sm:$0xff]
    %v42 = vld [vmem:[%s2] sm:$0x1]
    %v44 = vlaneseq
    %v45 = vshrl.u32 %v44, 7
    %v46 = vsub.s32 0, %v45
    %v47 = vrot.slane %v42, %v46
    %49 = vmatprep.subr.mxu0 0.0
    %50 = vmatpush1.msra.mxu0 %v25
    %51 = vmatprep.subr.mxu0 0.0
    %52 = vmatpush1.msra.mxu0 %v26
    %53 = vmatprep.subr.mxu0 0.0
    %54 = vmatpush1.msra.mxu0 %v27
    %55 = vmatprep.subr.mxu0 0.0
    %56 = vmatpush1.msra.mxu0 %v28
    %57 = vmatprep.subr.mxu0 0.0
    %58 = vmatpush1.msra.mxu0 %v29
    %59 = vmatprep.subr.mxu0 0.0
    %60 = vmatpush1.msra.mxu0 %v30
    %61 = vmatprep.subr.mxu0 0.0
    %62 = vmatpush1.msra.mxu0 %v31
    %63 = vmatprep.subr.mxu0 0.0
    %64 = vmatpush1.msra.mxu0 %v32
    %65 = vmatprep.subr.mxu0 0.0
    %66 = vmatpush1.msra.mxu0 %v33
    %67 = vmatprep.subr.mxu0 0.0
    %68 = vmatpush1.msra.mxu0 %v34
    %69 = vmatprep.subr.mxu0 0.0
    %70 = vmatpush1.msra.mxu0 %v35
    %71 = vmatprep.subr.mxu0 0.0
    %72 = vmatpush1.msra.mxu0 %v36
    %73 = vmatprep.subr.mxu0 0.0
    %74 = vmatpush1.msra.mxu0 %v37
    %75 = vmatprep.subr.mxu0 0.0
    %76 = vmatpush1.msra.mxu0 %v38
    %77 = vmatprep.subr.mxu0 0.0
    %78 = vmatpush1.msra.mxu0 %v39
    %79 = vmatprep.subr.mxu0 0.0
    %80 = vmatpush1.msra.mxu0 %v40
    %81 = vmatprep.subr.mxu0 0.0
    %82 = vmatpush1.msra.mxu0 0.0
    %83 = vmatprep.subr.mxu0 0.0
    %84 = vmatpush1.msra.mxu0 0.0
    %85 = vmatprep.subr.mxu0 0.0
    %86 = vmatpush1.msra.mxu0 0.0
    %87 = vmatprep.subr.mxu0 0.0
    %88 = vmatpush1.msra.mxu0 0.0
    %89 = vmatprep.subr.mxu0 0.0
    %90 = vmatpush1.msra.mxu0 0.0
    %91 = vmatprep.subr.mxu0 0.0
    %92 = vmatpush1.msra.mxu0 0.0
    %93 = vmatprep.subr.mxu0 0.0
    %94 = vmatpush1.msra.mxu0 0.0
    %95 = vmatprep.subr.mxu0 0.0
    %96 = vmatpush1.msra.mxu0 0.0
    %97 = vmatprep.subr.mxu0 0.0
    %98 = vmatpush1.msra.mxu0 0.0
    %99 = vmatprep.subr.mxu0 0.0
    %100 = vmatpush1.msra.mxu0 0.0
    %101 = vmatprep.subr.mxu0 0.0
    %102 = vmatpush1.msra.mxu0 0.0
    %103 = vmatprep.subr.mxu0 0.0
    %104 = vmatpush1.msra.mxu0 0.0
    %105 = vmatprep.subr.mxu0 0.0
    %106 = vmatpush1.msra.mxu0 0.0
    %107 = vmatprep.subr.mxu0 0.0
    %108 = vmatpush1.msra.mxu0 0.0
    %109 = vmatprep.subr.mxu0 0.0
    %110 = vmatpush1.msra.mxu0 0.0
    %111 = vmatprep.subr.mxu0 0.0
    %112 = vmatpush1.msra.mxu0 0.0
    %113 = vmatprep.mubr.f32.mxu0 0.0
    %114 = vmatmul.mubr.f32.gmra.mrb[0].mxu0 %v24
    %v115 = vpop.f32.mrb[0].mxu0
    %v116 = vadd.f32 %v47, %v115
    %v117 = vpop.f32.mrb[0].mxu0
    %118 = vdwg.mxu0
    %v119 = vmax.f32 %v116, 0.0
    %v120 = vld [vmem:[%s4] sm:$0x1]
    %v122 = vlaneseq
    %v123 = vshrl.u32 %v122, 7
    %v124 = vsub.s32 0, %v123
    %v125 = vrot.slane %v120, %v124
    %vm127 = vcmask 64512
    %v129 = vsel %vm127, %v119, 0
    %131 = vmatprep.subr.mxu0 0.0
    %132 = vmatpush1.msra.mxu0 %v41
    %133 = vmatprep.subr.mxu0 0.0
    %134 = vmatpush1.msra.mxu0 0.0
    %135 = vmatprep.subr.mxu0 0.0
    %136 = vmatpush1.msra.mxu0 0.0
    %137 = vmatprep.subr.mxu0 0.0
    %138 = vmatpush1.msra.mxu0 0.0
    %139 = vmatprep.subr.mxu0 0.0
    %140 = vmatpush1.msra.mxu0 0.0
    %141 = vmatprep.subr.mxu0 0.0
    %142 = vmatpush1.msra.mxu0 0.0
    %143 = vmatprep.subr.mxu0 0.0
    %144 = vmatpush1.msra.mxu0 0.0
    %145 = vmatprep.subr.mxu0 0.0
    %146 = vmatpush1.msra.mxu0 0.0
    %147 = vmatprep.subr.mxu0 0.0
    %148 = vmatpush1.msra.mxu0 0.0
    %149 = vmatprep.subr.mxu0 0.0
    %150 = vmatpush1.msra.mxu0 0.0
    %151 = vmatprep.subr.mxu0 0.0
    %152 = vmatpush1.msra.mxu0 0.0
    %153 = vmatprep.subr.mxu0 0.0
    %154 = vmatpush1.msra.mxu0 0.0
    %155 = vmatprep.subr.mxu0 0.0
    %156 = vmatpush1.msra.mxu0 0.0
    %157 = vmatprep.subr.mxu0 0.0
    %158 = vmatpush1.msra.mxu0 0.0
    %159 = vmatprep.subr.mxu0 0.0
    %160 = vmatpush1.msra.mxu0 0.0
    %161 = vmatprep.subr.mxu0 0.0
    %162 = vmatpush1.msra.mxu0 0.0
    %163 = vmatprep.subr.mxu0 0.0
    %164 = vmatpush1.msra.mxu0 0.0
    %165 = vmatprep.subr.mxu0 0.0
    %166 = vmatpush1.msra.mxu0 0.0
    %167 = vmatprep.subr.mxu0 0.0
    %168 = vmatpush1.msra.mxu0 0.0
    %169 = vmatprep.subr.mxu0 0.0
    %170 = vmatpush1.msra.mxu0 0.0
    %171 = vmatprep.subr.mxu0 0.0
    %172 = vmatpush1.msra.mxu0 0.0
    %173 = vmatprep.subr.mxu0 0.0
    %174 = vmatpush1.msra.mxu0 0.0
    %175 = vmatprep.subr.mxu0 0.0
    %176 = vmatpush1.msra.mxu0 0.0
    %177 = vmatprep.subr.mxu0 0.0
    %178 = vmatpush1.msra.mxu0 0.0
    %179 = vmatprep.subr.mxu0 0.0
    %180 = vmatpush1.msra.mxu0 0.0
    %181 = vmatprep.subr.mxu0 0.0
    %182 = vmatpush1.msra.mxu0 0.0
    %183 = vmatprep.subr.mxu0 0.0
    %184 = vmatpush1.msra.mxu0 0.0
    %185 = vmatprep.subr.mxu0 0.0
    %186 = vmatpush1.msra.mxu0 0.0
    %187 = vmatprep.subr.mxu0 0.0
    %188 = vmatpush1.msra.mxu0 0.0
    %189 = vmatprep.subr.mxu0 0.0
    %190 = vmatpush1.msra.mxu0 0.0
    %191 = vmatprep.subr.mxu0 0.0
    %192 = vmatpush1.msra.mxu0 0.0
    %193 = vmatprep.subr.mxu0 0.0
    %194 = vmatpush1.msra.mxu0 0.0
    %195 = vmatprep.mubr.f32.mxu0 0.0
    %196 = vmatmul.mubr.f32.gmra.mrb[0].mxu0 %v129
    %v197 = vpop.f32.mrb[0].mxu0
    %v198 = vadd.f32 %v125, %v197
    %v199 = vpop.f32.mrb[0].mxu0
    %200 = vdwg.mxu0
    %v201 = vld [vmem:[%s5] sm:$0xf]
    %v203 = vlaneseq
    %v204 = vshrl.u32 %v203, 7
    %v205 = vsub.s32 0, %v204
    %v206 = vrot.slane %v201, %v205
    %v207 = vlaneseq
    %v208 = vshrl.u32 %v207, 7
    %v209 = vsub.s32 1, %v208
    %v210 = vrot.slane %v201, %v209
    %v211 = vlaneseq
    %v212 = vshrl.u32 %v211, 7
    %v213 = vsub.s32 2, %v212
    %v214 = vrot.slane %v201, %v213
    %v215 = vlaneseq
    %v216 = vshrl.u32 %v215, 7
    %v217 = vsub.s32 3, %v216
    %v218 = vrot.slane %v201, %v217
    %v223 = vadd.f32 %v206, %v198
    %v224 = vadd.f32 %v210, %v198
    %v225 = vadd.f32 %v214, %v198
    %v226 = vadd.f32 %v218, %v198
    %v231 = vcombine.low %v223, %v224
    %v232 = vcombine.low %v225, %v226
    %v234 = vunpack.c.l.s4 1983009808
    %v235 = vunpack.c.0.s8 %v234
    %v236 = vlaneseq
    %v237 = vshrl.u32 %v236, 7
    %v238 = vsub.s32 %v235, %v237
    %v239 = vrot.slane %v231, %v238
    %v241 = vunpack.c.l.s4 1983009808
    %v242 = vunpack.c.0.s8 %v241
    %v243 = vlaneseq
    %v244 = vshrl.u32 %v243, 7
    %v245 = vsub.s32 %v242, %v244
    %v246 = vrot.slane %v232, %v245
    %v247 = vcombine.low %v239, %v246
    %249 = vst [vmem:[#allocation2] sm:$0xff] %v247
    // Predicated region
    $region26: #{tpu_custom_call.1} parent=1 // pred_check
      _
    $region27: #{tpu_custom_call.1} parent=1 // pred_check_branch
      %251 = sbr.rel (0) target = $region29
    $region28: #{tpu_custom_call.1} parent=1 // pred_region
      %s253 = ssub.s32 128, 128
      %254 = vsyncadd [#allocation3], %s253
      %s256 = sshll.u32 [#allocation2], 4
      %s257 = int_to_ptr.vmem [resolvable:$true] %s256
      %259 = dma.vmem_to_hbm [thread:$0]  %s257, 128, %s6, [#allocation3]
    $region29: #{tpu_custom_call.1} parent=1 // pred_fallthru
      _
    // Predicated region
    $region30: #{tpu_custom_call.1} parent=1 // pred_check
      _
    $region31: #{tpu_custom_call.1} parent=1 // pred_check_branch
      %261 = sbr.rel (0) target = $region33
    $region32: #{tpu_custom_call.1} parent=1 // pred_region
      %262 = dma.done [#allocation3], 128
    $region33: #{tpu_custom_call.1} parent=1 // pred_fallthru
      _
    %263 = vsyncpa [#allocation3], 1

</llo_original>
